<compile_context>
chip_gen: v5e
topology: v5e:2x2
jax: 0.10.0
libtpu: 0.0.40
codegen_flags: <defaults>
</compile_context>

<pallas_src>
import functools

import jax
import jax.numpy as jnp
from jax import lax
from jax.experimental import pallas as pl
from jax.experimental.pallas import tpu as pltpu


def _graph_cut_kernel(feat_ref, lab_row_ref, lab_col_ref, iou_ref,
                      num_ref, cnt_ref, *,
                      block_m, inv_temperature, iou_threshold, lamda,
                      reweight_func):
    i = pl.program_id(0)
    row_start = pl.multiple_of(i * block_m, block_m)

    f_all = feat_ref[...]                                   # [M, K]  bf16 (resident)
    lhs = feat_ref[pl.ds(row_start, block_m), :]            # [Tm, K] bf16 (this row block)
    # Fold 1/temperature into the small LHS block only (stays bf16, weak scalar).
    lhs_scaled = lhs * inv_temperature                      # [Tm, K] bf16

    # MXU: bf16 x bf16 -> f32 accumulation; transpose via contraction dims (no relayout).
    sim = lax.dot_general(
        lhs_scaled, f_all,
        dimension_numbers=(((1,), (1,)), ((), ())),
        preferred_element_type=jnp.float32)                 # [Tm, M] f32

    # Row max is taken BEFORE the diagonal is zeroed (matches the reference).
    row_max = jnp.max(sim, axis=1, keepdims=True)           # [Tm, 1]
    e = jnp.exp(sim - row_max)                              # [Tm, M] f32  (values <= 1)

    # total / same-label / diagonal decomposition: one select pass, no iota mask.
    total_row = jnp.sum(e, axis=1, keepdims=True)           # [Tm, 1]
    eq = lab_col_ref[...] == lab_row_ref[...]                # [Tm, M] bool (int32 compare)
    eq_row = jnp.sum(jnp.where(eq, e, 0.0), axis=1, keepdims=True)   # [Tm, 1]

    # Diagonal term e_ii rebuilt from the exact bf16 MXU operands ([Tm, K] VPU work).
    diag_sim = jnp.sum(lhs_scaled.astype(jnp.float32) * lhs.astype(jnp.float32),
                       axis=1, keepdims=True)                # [Tm, 1]
    diag_e = jnp.exp(diag_sim - row_max)                     # [Tm, 1]

    pos_sum = eq_row - diag_e            # same-label, diagonal removed
    neg_sum = total_row - eq_row         # different-label (diagonal never included)
    log_prob = lamda * pos_sum - neg_sum                     # [Tm, 1] f32

    iou = iou_ref[...]                                       # [Tm, 1] f32
    if reweight_func == 'none':
        coef = jnp.ones_like(iou)
    elif reweight_func == 'linear':
        coef = iou
    elif reweight_func == 'exp':
        coef = jnp.exp(iou) - 1.0
    else:
        raise ValueError(f"unknown reweight_func: {reweight_func}")

    keep = iou >= iou_threshold                              # [Tm, 1] bool
    loss_vec = jnp.where(keep, -log_prob * coef, 0.0)        # [Tm, 1]

    # Per-block partials (safe under a "parallel" grid axis); reduced in the wrapper.
    num_ref[...] = jnp.sum(loss_vec).reshape(1, 1, 1)
    cnt_ref[...] = jnp.sum(keep.astype(jnp.float32)).reshape(1, 1, 1)


def _pick_block_m(m, target):
    """Largest multiple-of-8 divisor of m that is <= target (falls back to m)."""
    if m <= target:
        return m
    bm = (min(target, m) // 8) * 8
    while bm >= 8:
        if m % bm == 0:
            return bm
        bm -= 8
    # TODO(synk): for M with no multiple-of-8 divisor, pad M and mask padded columns.
    return m


def graph_cut_forward(features, labels, ious, *, temperature=0.2,
                      iou_threshold=0.5, reweight_func='none', lamda=1.0,
                      block_m=256):
    """GraphCut.forward as a row-block-tiled Pallas TPU kernel (forward only)."""
    M, K = features.shape
    bm = _pick_block_m(M, block_m)
    grid_m = M // bm

    feat = features.astype(jnp.bfloat16)              # bf16 MXU operands, f32 accum
    lab_row = labels.astype(jnp.int32).reshape(1, M)  # row layout (resident)
    lab_col = labels.astype(jnp.int32).reshape(M, 1)  # column layout (per row block)
    iou_col = ious.astype(jnp.float32).reshape(M, 1)

    kernel = functools.partial(
        _graph_cut_kernel,
        block_m=bm,
        inv_temperature=1.0 / float(temperature),
        iou_threshold=float(iou_threshold),
        lamda=float(lamda),
        reweight_func=reweight_func)

    # VMEM budget: resident bf16 features (x2 buffers), two live f32 [bm, M] slabs
    # (+ pipeline headroom), small vectors, margin.  Capped under v7x's 64 MiB.
    need = (2 * M * K * 2) + (4 * bm * M * 4) + (2 * (M + 4 * bm) * 4) + (2 << 20)
    vmem_limit = int(min(max(need, 8 << 20), 60 << 20))

    cost = pl.CostEstimate(
        flops=2 * M * M * K + 8 * M * M,
        transcendentals=M * M + M,
        bytes_accessed=M * K * 2 + 3 * M * 4 + 2 * grid_m * 4)

    out_num, out_cnt = pl.pallas_call(
        kernel,
        grid=(grid_m,),
        out_shape=(jax.ShapeDtypeStruct((grid_m, 1, 1), jnp.float32),
                   jax.ShapeDtypeStruct((grid_m, 1, 1), jnp.float32)),
        in_specs=[
            pl.BlockSpec((M, K), lambda i: (0, 0)),    # features, resident (DMA once)
            pl.BlockSpec((1, M), lambda i: (0, 0)),    # labels (row layout), resident
            pl.BlockSpec((bm, 1), lambda i: (i, 0)),   # labels for this row block
            pl.BlockSpec((bm, 1), lambda i: (i, 0)),   # ious for this row block
        ],
        out_specs=(pl.BlockSpec((1, 1, 1), lambda i: (i, 0, 0)),
                   pl.BlockSpec((1, 1, 1), lambda i: (i, 0, 0))),
        compiler_params=pltpu.CompilerParams(
            dimension_semantics=("parallel",),
            vmem_limit_bytes=vmem_limit),
        cost_estimate=cost,
    )(feat, lab_row, lab_col, iou_col)

    # Masked-mean == boolean-gather mean; summing partials before the divide
    # preserves the 0/0 -> NaN behavior when nothing passes the IoU threshold.
    return jnp.sum(out_num) / jnp.sum(out_cnt)


def _graph_cut_reference(features, labels, ious, *, temperature=0.2,
                         iou_threshold=0.5, reweight_func='none', lamda=1.0):
    """Pure-JAX f32 reference mirroring the PyTorch forward (masked mean)."""
    m = features.shape[0]
    lab = labels.reshape(-1, 1)
    eye = jnp.eye(m, dtype=jnp.float32)
    mask_pos = (lab == lab.T).astype(jnp.float32) * (1.0 - eye)
    mask_neg = (1.0 - (lab == lab.T).astype(jnp.float32)) * (1.0 - eye)
    sim = (features @ features.T) / temperature
    sim = sim - jnp.max(sim, axis=1, keepdims=True)
    exp_sim = jnp.exp(sim) * (1.0 - eye)
    log_prob = (lamda * (exp_sim * mask_pos).sum(1, keepdims=True)
                - (exp_sim * mask_neg).sum(1, keepdims=True))
    if reweight_func == 'none':
        coef = jnp.ones_like(ious)
    elif reweight_func == 'linear':
        coef = ious
    else:
        coef = jnp.exp(ious) - 1.0
    keep = (ious >= iou_threshold).astype(jnp.float32).reshape(-1, 1)
    loss = -log_prob * coef.reshape(-1, 1)
    return (loss * keep).sum() / keep.sum()


if __name__ == "__main__":
    key = jax.random.PRNGKey(0)
    M, K = 64, 32
    kf, kl, ki = jax.random.split(key, 3)

    features = jax.random.normal(kf, (M, K), dtype=jnp.float32)
    # The module compares cosine-style similarities; L2-normalize the embeddings.
    features = features / jnp.linalg.norm(features, axis=1, keepdims=True)
    labels = jax.random.randint(kl, (M,), 0, 20, dtype=jnp.int32)
    ious = jax.random.uniform(ki, (M,), dtype=jnp.float32)
    # Guarantee some proposals pass the IoU threshold deterministically.
    ious = ious.at[:4].set(0.9)

    ref = _graph_cut_reference(features, labels, ious)

    # Single-block path (block_m >= M) and multi-block path (4 row blocks).
    loss_single = jax.block_until_ready(graph_cut_forward(features, labels, ious))
    loss_tiled = jax.block_until_ready(
        graph_cut_forward(features, labels, ious, block_m=16))

    # bf16 MXU operands -> relaxed tolerance vs the pure-f32 reference.
    assert jnp.allclose(loss_single, ref, rtol=5e-2, atol=5e-2), (loss_single, ref)
    assert jnp.allclose(loss_tiled, ref, rtol=5e-2, atol=5e-2), (loss_tiled, ref)
    assert jnp.allclose(loss_single, loss_tiled, rtol=1e-5, atol=1e-5), (
        loss_single, loss_tiled)

    print("KERNEL_OK")
</pallas_src>

<mosaic_0001>
module attributes {stable_mosaic.version = 11 : i64} {
  func.func @_graph_cut_kernel(%arg0: i32, %arg1: memref<64x32xbf16, #tpu.memory_space<vmem>>, %arg2: memref<1x64xi32, #tpu.memory_space<vmem>>, %arg3: memref<64x1xi32, #tpu.memory_space<vmem>>, %arg4: memref<64x1xf32, #tpu.memory_space<vmem>>, %arg5: memref<1x1x1xf32, #tpu.memory_space<vmem>>, %arg6: memref<1x1x1xf32, #tpu.memory_space<vmem>>) attributes {dimension_semantics = [#tpu.dimension_semantics<parallel>], iteration_bounds = array<i64: 1>, scalar_prefetch = 0 : i64, scratch_operands = 0 : i64, tpu.core_type = #tpu.core_type<tc>, window_params = [{pipeline_mode = #tpu.pipeline_mode<synchronous>, transform_indices = @transform_0, window_bounds = array<i64: 64, 32>}, {pipeline_mode = #tpu.pipeline_mode<synchronous>, transform_indices = @transform_1, window_bounds = array<i64: 1, 64>}, {transform_indices = @transform_2, window_bounds = array<i64: 64, 1>}, {transform_indices = @transform_3, window_bounds = array<i64: 64, 1>}, {transform_indices = @transform_4, window_bounds = array<i64: 1, 1, 1>}, {transform_indices = @transform_5, window_bounds = array<i64: 1, 1, 1>}]} {
    %c64_i32 = arith.constant 64 : i32
    %0 = arith.muli %arg0, %c64_i32 : i32
    %1 = tpu.assume_multiple %0, 64 : i32
    %c0 = arith.constant 0 : index
    %c0_0 = arith.constant 0 : index
    %2 = vector.load %arg1[%c0, %c0_0] : memref<64x32xbf16, #tpu.memory_space<vmem>>, vector<64x32xbf16>
    %3 = arith.index_cast %1 : i32 to index
    %c0_1 = arith.constant 0 : index
    %4 = vector.load %arg1[%3, %c0_1] : memref<64x32xbf16, #tpu.memory_space<vmem>>, vector<64x32xbf16>
    %cst = arith.constant 5.000000e+00 : bf16
    %5 = vector.broadcast %cst : bf16 to vector<64x32xbf16>
    %6 = arith.mulf %4, %5 : vector<64x32xbf16>
    %cst_2 = arith.constant dense<0.000000e+00> : vector<64x64xf32>
    %7 = tpu.matmul %6, %2, %cst_2 {dimension_numbers = #tpu.dot_dimension_numbers<[1], [1], [0], [0], [0, 0, 1, 0], [], []>} : vector<64x32xbf16>, vector<64x32xbf16>, vector<64x64xf32> -> vector<64x64xf32>
    %cst_3 = arith.constant dense<0xFF800000> : vector<64xf32>
    %8 = vector.multi_reduction <maximumf>, %7, %cst_3 [1] : vector<64x64xf32> to vector<64xf32>
    %9 = vector.shape_cast %8 : vector<64xf32> to vector<64x1xf32>
    %10 = vector.broadcast %9 : vector<64x1xf32> to vector<64x64xf32>
    %11 = arith.subf %7, %10 : vector<64x64xf32>
    %12 = math.exp %11 : vector<64x64xf32>
    %cst_4 = arith.constant dense<0.000000e+00> : vector<64xf32>
    %13 = vector.multi_reduction <add>, %12, %cst_4 [1] : vector<64x64xf32> to vector<64xf32>
    %14 = vector.shape_cast %13 : vector<64xf32> to vector<64x1xf32>
    %c0_5 = arith.constant 0 : index
    %c0_6 = arith.constant 0 : index
    %15 = vector.load %arg3[%c0_5, %c0_6] : memref<64x1xi32, #tpu.memory_space<vmem>>, vector<64x1xi32>
    %c0_7 = arith.constant 0 : index
    %c0_8 = arith.constant 0 : index
    %16 = vector.load %arg2[%c0_7, %c0_8] : memref<1x64xi32, #tpu.memory_space<vmem>>, vector<1x64xi32>
    %17 = vector.broadcast %15 : vector<64x1xi32> to vector<64x64xi32>
    %18 = vector.broadcast %16 : vector<1x64xi32> to vector<64x64xi32>
    %19 = arith.cmpi eq, %17, %18 : vector<64x64xi32>
    %cst_9 = arith.constant 0.000000e+00 : f32
    %20 = vector.broadcast %cst_9 : f32 to vector<64x64xf32>
    %21 = arith.select %19, %12, %20 : vector<64x64xi1>, vector<64x64xf32>
    %cst_10 = arith.constant dense<0.000000e+00> : vector<64xf32>
    %22 = vector.multi_reduction <add>, %21, %cst_10 [1] : vector<64x64xf32> to vector<64xf32>
    %23 = vector.shape_cast %22 : vector<64xf32> to vector<64x1xf32>
    %24 = arith.extf %6 : vector<64x32xbf16> to vector<64x32xf32>
    %25 = arith.extf %4 : vector<64x32xbf16> to vector<64x32xf32>
    %26 = arith.mulf %24, %25 : vector<64x32xf32>
    %cst_11 = arith.constant dense<0.000000e+00> : vector<64xf32>
    %27 = vector.multi_reduction <add>, %26, %cst_11 [1] : vector<64x32xf32> to vector<64xf32>
    %28 = vector.shape_cast %27 : vector<64xf32> to vector<64x1xf32>
    %29 = arith.subf %28, %9 : vector<64x1xf32>
    %30 = math.exp %29 : vector<64x1xf32>
    %31 = arith.subf %23, %30 : vector<64x1xf32>
    %32 = arith.subf %14, %23 : vector<64x1xf32>
    %cst_12 = arith.constant 1.000000e+00 : f32
    %33 = vector.broadcast %cst_12 : f32 to vector<64x1xf32>
    %34 = arith.mulf %33, %31 : vector<64x1xf32>
    %35 = arith.subf %34, %32 : vector<64x1xf32>
    %c0_13 = arith.constant 0 : index
    %c0_14 = arith.constant 0 : index
    %36 = vector.load %arg4[%c0_13, %c0_14] : memref<64x1xf32, #tpu.memory_space<vmem>>, vector<64x1xf32>
    %cst_15 = arith.constant 1.000000e+00 : f32
    %37 = vector.broadcast %cst_15 : f32 to vector<64x1xf32>
    %cst_16 = arith.constant 5.000000e-01 : f32
    %38 = vector.broadcast %cst_16 : f32 to vector<64x1xf32>
    %39 = arith.cmpf oge, %36, %38 : vector<64x1xf32>
    %cst_17 = arith.constant 0.000000e+00 : f32
    %40 = vector.broadcast %cst_17 : f32 to vector<64x1xf32>
    %41 = arith.subf %40, %35 : vector<64x1xf32>
    %42 = arith.mulf %41, %37 : vector<64x1xf32>
    %cst_18 = arith.constant 0.000000e+00 : f32
    %43 = vector.broadcast %cst_18 : f32 to vector<64x1xf32>
    %44 = arith.select %39, %42, %43 : vector<64x1xi1>, vector<64x1xf32>
    %45 = vector.shape_cast %44 : vector<64x1xf32> to vector<1x64x1xf32>
    %cst_19 = arith.constant dense<0.000000e+00> : vector<1xf32>
    %46 = vector.multi_reduction <add>, %45, %cst_19 [1, 2] : vector<1x64x1xf32> to vector<1xf32>
    %47 = vector.shape_cast %46 : vector<1xf32> to vector<1x1x1xf32>
    %48 = vector.extract %47[0, 0, 0] : f32 from vector<1x1x1xf32>
    %49 = vector.broadcast %48 : f32 to vector<1x1x1xf32>
    %c0_20 = arith.constant 0 : index
    %c0_21 = arith.constant 0 : index
    %c0_22 = arith.constant 0 : index
    %50 = vector.load %arg5[%c0_20, %c0_21, %c0_22] : memref<1x1x1xf32, #tpu.memory_space<vmem>>, vector<1x1x1xf32>
    tpu.vector_store %arg5[%c0_20, %c0_21, %c0_22], %49 {strides = array<i32>} : memref<1x1x1xf32, #tpu.memory_space<vmem>>, vector<1x1x1xf32>,
    %51 = arith.extui %39 : vector<64x1xi1> to vector<64x1xi32>
    %52 = arith.sitofp %51 : vector<64x1xi32> to vector<64x1xf32>
    %53 = vector.shape_cast %52 : vector<64x1xf32> to vector<1x64x1xf32>
    %cst_23 = arith.constant dense<0.000000e+00> : vector<1xf32>
    %54 = vector.multi_reduction <add>, %53, %cst_23 [1, 2] : vector<1x64x1xf32> to vector<1xf32>
    %55 = vector.shape_cast %54 : vector<1xf32> to vector<1x1x1xf32>
    %56 = vector.extract %55[0, 0, 0] : f32 from vector<1x1x1xf32>
    %57 = vector.broadcast %56 : f32 to vector<1x1x1xf32>
    %c0_24 = arith.constant 0 : index
    %c0_25 = arith.constant 0 : index
    %c0_26 = arith.constant 0 : index
    %58 = vector.load %arg6[%c0_24, %c0_25, %c0_26] : memref<1x1x1xf32, #tpu.memory_space<vmem>>, vector<1x1x1xf32>
    tpu.vector_store %arg6[%c0_24, %c0_25, %c0_26], %57 {strides = array<i32>} : memref<1x1x1xf32, #tpu.memory_space<vmem>>, vector<1x1x1xf32>,
    return
  }
  func.func @transform_0(%arg0: i32) -> (i32, i32) {
    %c0_i32 = arith.constant 0 : i32
    %c0_i32_0 = arith.constant 0 : i32
    %c0_i32_1 = arith.constant 0 : i32
    return %c0_i32, %c0_i32_0 : i32, i32
  }
  func.func @transform_1(%arg0: i32) -> (i32, i32) {
    %c0_i32 = arith.constant 0 : i32
    %c0_i32_0 = arith.constant 0 : i32
    %c0_i32_1 = arith.constant 0 : i32
    return %c0_i32, %c0_i32_0 : i32, i32
  }
  func.func @transform_2(%arg0: i32) -> (i32, i32) {
    %c0_i32 = arith.constant 0 : i32
    %c0_i32_0 = arith.constant 0 : i32
    return %arg0, %c0_i32 : i32, i32
  }
  func.func @transform_3(%arg0: i32) -> (i32, i32) {
    %c0_i32 = arith.constant 0 : i32
    %c0_i32_0 = arith.constant 0 : i32
    return %arg0, %c0_i32 : i32, i32
  }
  func.func @transform_4(%arg0: i32) -> (i32, i32, i32) {
    %c0_i32 = arith.constant 0 : i32
    %c0_i32_0 = arith.constant 0 : i32
    %c0_i32_1 = arith.constant 0 : i32
    return %arg0, %c0_i32, %c0_i32_0 : i32, i32, i32
  }
  func.func @transform_5(%arg0: i32) -> (i32, i32, i32) {
    %c0_i32 = arith.constant 0 : i32
    %c0_i32_0 = arith.constant 0 : i32
    %c0_i32_1 = arith.constant 0 : i32
    return %arg0, %c0_i32, %c0_i32_0 : i32, i32, i32
  }
}

</mosaic_0001>

<llo_original>
// kernel: tpu_custom_call.1
$region0: #{tpu_custom_call.1}
  #allocation0 [shape = 'u32[]', space=smem, size = 0x4, offset = 0x4, fixed_abs, tag = 'smem constant byte address 0x4 - core index']
  #allocation1 [shape = 'u32[72,128]{1,0:T(1,128)}', space=vmem, size = 0x9000, scoped, tag = 'internal scratch']
  %s0 = inlined_call_operand.vmem [shape: bf16[64,32], index: 0, kind: input, shape index: {}]
  %s1 = inlined_call_operand.vmem [shape: s32[1,64], index: 1, kind: input, shape index: {}]
  %s2 = inlined_call_operand.vmem [shape: s32[64,1], index: 2, kind: input, shape index: {}]
  %s3 = inlined_call_operand.vmem [shape: f32[64,1], index: 3, kind: input, shape index: {}]
  %s4 = inlined_call_operand.hbm [shape: f32[1,1,1], index: 4, kind: output, shape index: {0}]
  %s5 = inlined_call_operand.hbm [shape: f32[1,1,1], index: 5, kind: output, shape index: {1}]
  %6 = xla_tuple %s4, %s5
  %s7 = sld [smem:[#allocation0]]
  $region34: #{tpu_custom_call.1} parent=0
    _
  %s9 = ssub.s32 1, %s7
  %s10 = scalar_select 0, %s9, %s7
  $region1: #{tpu_custom_call.1} parent=0
    #allocation2 [shape = 'u8[512]{0}', space=vmem, size = 0x400, scoped, tag = 'output window, operand 0, single buffered']
    #allocation3 [shape = 's32[1]{0}', space=sflag, size = 0x4, scoped, tag = 'scoped memory for tpu_custom_call.1']
    #allocation4 [shape = 'u8[512]{0}', space=vmem, size = 0x400, scoped, tag = 'output window, operand 1, single buffered']
    #allocation5 [shape = 's32[1]{0}', space=sflag, size = 0x4, scoped, tag = 'scoped memory for tpu_custom_call.1']
    %11 = vsyncpa [#allocation3], 0
    %12 = vsyncpa [#allocation5], 0
    // Predicated region
    $region2: #{tpu_custom_call.1} parent=1 // pred_check
      _
    $region3: #{tpu_custom_call.1} parent=1 // pred_check_branch
      %14 = sbr.rel (0) target = $region5
    $region4: #{tpu_custom_call.1} parent=1 // pred_region
      _
    $region5: #{tpu_custom_call.1} parent=1 // pred_fallthru
      _
    // Predicated region
    $region6: #{tpu_custom_call.1} parent=1 // pred_check
      _
    $region7: #{tpu_custom_call.1} parent=1 // pred_check_branch
      %16 = sbr.rel (0) target = $region9
    $region8: #{tpu_custom_call.1} parent=1 // pred_region
      _
    $region9: #{tpu_custom_call.1} parent=1 // pred_fallthru
      _
    // Predicated region
    $region10: #{tpu_custom_call.1} parent=1 // pred_check
      _
    $region11: #{tpu_custom_call.1} parent=1 // pred_check_branch
      %18 = sbr.rel (0) target = $region13
    $region12: #{tpu_custom_call.1} parent=1 // pred_region
      _
    $region13: #{tpu_custom_call.1} parent=1 // pred_fallthru
      _
    // Predicated region
    $region14: #{tpu_custom_call.1} parent=1 // pred_check
      _
    $region15: #{tpu_custom_call.1} parent=1 // pred_check_branch
      %20 = sbr.rel (0) target = $region17
    $region16: #{tpu_custom_call.1} parent=1 // pred_region
      _
    $region17: #{tpu_custom_call.1} parent=1 // pred_fallthru
      _
    %s22 = smul.u32 0, 64
    %v23 = vld [vmem:[%s0] sm:$0xf]
    %v24 = vld [vmem:[%s0 + $0x4] sm:$0xf]
    %v25 = vld [vmem:[%s0 + $0x8] sm:$0xf]
    %v26 = vld [vmem:[%s0 + $0xc] sm:$0xf]
    %v27 = vld [vmem:[%s0 + $0x10] sm:$0xf]
    %v28 = vld [vmem:[%s0 + $0x14] sm:$0xf]
    %v29 = vld [vmem:[%s0 + $0x18] sm:$0xf]
    %v30 = vld [vmem:[%s0 + $0x1c] sm:$0xf]
    %s31 = sshra.s32 %s22, 3
    %s32 = sand.u32 %s22, 7
    %s33 = smul.addr %s31, 4
    %s34 = scalar_lea.vmem %s0, %s33
    %v35 = vld [vmem:[%s34] sm:$0xf]
    %v36 = vld [vmem:[%s34 + $0x4] sm:$0xf]
    %v37 = vld [vmem:[%s34 + $0x8] sm:$0xf]
    %v38 = vld [vmem:[%s34 + $0xc] sm:$0xf]
    %v39 = vld [vmem:[%s34 + $0x10] sm:$0xf]
    %v40 = vld [vmem:[%s34 + $0x14] sm:$0xf]
    %v41 = vld [vmem:[%s34 + $0x18] sm:$0xf]
    %v42 = vld [vmem:[%s34 + $0x1c] sm:$0xf]
    %v43 = vunpack.c.l.bf16 %v35
    %v44 = vunpack.c.l.bf16 %v36
    %v45 = vunpack.c.l.bf16 %v37
    %v46 = vunpack.c.l.bf16 %v38
    %v47 = vunpack.c.l.bf16 %v39
    %v48 = vunpack.c.l.bf16 %v40
    %v49 = vunpack.c.l.bf16 %v41
    %v50 = vunpack.c.l.bf16 %v42
    %v51 = vmul.f32 %v43, 5.0
    %v52 = vmul.f32 %v44, 5.0
    %v53 = vmul.f32 %v45, 5.0
    %v54 = vmul.f32 %v46, 5.0
    %v55 = vmul.f32 %v47, 5.0
    %v56 = vmul.f32 %v48, 5.0
    %v57 = vmul.f32 %v49, 5.0
    %v58 = vmul.f32 %v50, 5.0
    %v59 = vpack.c.bf16 %v51, %v51
    %v60 = vpack.c.bf16 %v52, %v52
    %v61 = vpack.c.bf16 %v53, %v53
    %v62 = vpack.c.bf16 %v54, %v54
    %v63 = vpack.c.bf16 %v55, %v55
    %v64 = vpack.c.bf16 %v56, %v56
    %v65 = vpack.c.bf16 %v57, %v57
    %v66 = vpack.c.bf16 %v58, %v58
    %v75 = vunpack.c.l.b16 %v59
    %v76 = vunpack.c.l.b16 %v60
    %v77 = vunpack.c.l.b16 %v61
    %v78 = vunpack.c.l.b16 %v62
    %v79 = vunpack.c.l.b16 %v63
    %v80 = vunpack.c.l.b16 %v64
    %v81 = vunpack.c.l.b16 %v65
    %v82 = vunpack.c.l.b16 %v66
    %v83 = vpack.c.b16 %v76, %v75
    %v84 = vpack.c.b16 %v78, %v77
    %v85 = vpack.c.b16 %v80, %v79
    %v86 = vpack.c.b16 %v82, %v81
    %v95 = vunpack.c.l.b16 %v23
    %v96 = vunpack.c.l.b16 %v24
    %v97 = vunpack.c.l.b16 %v25
    %v98 = vunpack.c.l.b16 %v26
    %v99 = vunpack.c.l.b16 %v27
    %v100 = vunpack.c.l.b16 %v28
    %v101 = vunpack.c.l.b16 %v29
    %v102 = vunpack.c.l.b16 %v30
    %v103 = vpack.c.b16 %v96, %v95
    %v104 = vpack.c.b16 %v98, %v97
    %v105 = vpack.c.b16 %v100, %v99
    %v106 = vpack.c.b16 %v102, %v101
    %vm107 = vcmask 261120
    %v109 = vsel %vm107, %v83, 0
    %v112 = vsel %vm107, %v84, 0
    %v115 = vsel %vm107, %v85, 0
    %v118 = vsel %vm107, %v86, 0
    %v121 = vsel %vm107, %v103, 0
    %v124 = vsel %vm107, %v104, 0
    %v127 = vsel %vm107, %v105, 0
    %v130 = vsel %vm107, %v106, 0
    %132 = vmatpush.bf16.xpose.msra.mxu0 0
    %133 = vmatpush.bf16.xpose.msra.mxu0 0
    %134 = vmatpush.bf16.xpose.msra.mxu0 0
    %135 = vmatpush.bf16.xpose.msra.mxu0 0
    %136 = vmatpush.bf16.xpose.msra.mxu0 %v130
    %137 = vmatpush.bf16.xpose.msra.mxu0 %v127
    %138 = vmatpush.bf16.xpose.msra.mxu0 %v124
    %139 = vmatpush.bf16.xpose.msra.mxu0 %v121
    %140 = vmatmul.bf16.gmra.mxu0 %v109
    %v141 = vpop.f32.mrf.mxu0
    %v142 = vadd.f32 0.0, %v141
    %v143 = vpop.f32.mrf.mxu0
    %v144 = vadd.f32 0.0, %v143
    %145 = vmatmul.bf16.gmra.mxu0 %v112
    %v146 = vpop.f32.mrf.mxu0
    %v147 = vadd.f32 0.0, %v146
    %v148 = vpop.f32.mrf.mxu0
    %v149 = vadd.f32 0.0, %v148
    %150 = vmatmul.bf16.gmra.mxu0 %v115
    %v151 = vpop.f32.mrf.mxu0
    %v152 = vadd.f32 0.0, %v151
    %v153 = vpop.f32.mrf.mxu0
    %v154 = vadd.f32 0.0, %v153
    %155 = vmatmul.bf16.gmra.mxu0 %v118
    %v156 = vpop.f32.mrf.mxu0
    %v157 = vadd.f32 0.0, %v156
    %v158 = vpop.f32.mrf.mxu0
    %v159 = vadd.f32 0.0, %v158
    %160 = vdwg.mxu0
    %vm161 = vcmask 523264
    %v162 = vsel %vm161, %v142, -inf
    %163 = vmax.xlane.f32.xlu0 %v162
    %v164 = vpop.xlane.xlu0 %163
    %v165 = vsel %vm161, %v144, -inf
    %166 = vmax.xlane.f32.xlu0 %v165
    %v167 = vpop.xlane.xlu0 %166
    %v168 = vsel %vm161, %v147, -inf
    %169 = vmax.xlane.f32.xlu0 %v168
    %v170 = vpop.xlane.xlu0 %169
    %v171 = vsel %vm161, %v149, -inf
    %172 = vmax.xlane.f32.xlu0 %v171
    %v173 = vpop.xlane.xlu0 %172
    %v174 = vsel %vm161, %v152, -inf
    %175 = vmax.xlane.f32.xlu0 %v174
    %v176 = vpop.xlane.xlu0 %175
    %v177 = vsel %vm161, %v154, -inf
    %178 = vmax.xlane.f32.xlu0 %v177
    %v179 = vpop.xlane.xlu0 %178
    %v180 = vsel %vm161, %v157, -inf
    %181 = vmax.xlane.f32.xlu0 %v180
    %v182 = vpop.xlane.xlu0 %181
    %v183 = vsel %vm161, %v159, -inf
    %184 = vmax.xlane.f32.xlu0 %v183
    %v185 = vpop.xlane.xlu0 %184
    %v186 = vsub.f32 %v142, %v164
    %v187 = vsub.f32 %v144, %v167
    %v188 = vsub.f32 %v147, %v170
    %v189 = vsub.f32 %v149, %v173
    %v190 = vsub.f32 %v152, %v176
    %v191 = vsub.f32 %v154, %v179
    %v192 = vsub.f32 %v157, %v182
    %v193 = vsub.f32 %v159, %v185
    %v194 = vmul.f32 %v186, 1.442695
    %v195 = vpow.pop %v194
    %v196 = vmul.f32 %v187, 1.442695
    %v197 = vpow.pop %v196
    %v198 = vmul.f32 %v188, 1.442695
    %v199 = vpow.pop %v198
    %v200 = vmul.f32 %v189, 1.442695
    %v201 = vpow.pop %v200
    %v202 = vmul.f32 %v190, 1.442695
    %v203 = vpow.pop %v202
    %v204 = vmul.f32 %v191, 1.442695
    %v205 = vpow.pop %v204
    %v206 = vmul.f32 %v192, 1.442695
    %v207 = vpow.pop %v206
    %v208 = vmul.f32 %v193, 1.442695
    %v209 = vpow.pop %v208
    %v210 = vsel %vm161, %v195, 0.0
    %211 = vadd.xlane.f32.xlu0 %v210
    %v212 = vpop.xlane.xlu0 %211
    %v213 = vsel %vm161, %v197, 0.0
    %214 = vadd.xlane.f32.xlu0 %v213
    %v215 = vpop.xlane.xlu0 %214
    %v216 = vsel %vm161, %v199, 0.0
    %217 = vadd.xlane.f32.xlu0 %v216
    %v218 = vpop.xlane.xlu0 %217
    %v219 = vsel %vm161, %v201, 0.0
    %220 = vadd.xlane.f32.xlu0 %v219
    %v221 = vpop.xlane.xlu0 %220
    %v222 = vsel %vm161, %v203, 0.0
    %223 = vadd.xlane.f32.xlu0 %v222
    %v224 = vpop.xlane.xlu0 %223
    %v225 = vsel %vm161, %v205, 0.0
    %226 = vadd.xlane.f32.xlu0 %v225
    %v227 = vpop.xlane.xlu0 %226
    %v228 = vsel %vm161, %v207, 0.0
    %229 = vadd.xlane.f32.xlu0 %v228
    %v230 = vpop.xlane.xlu0 %229
    %v231 = vsel %vm161, %v209, 0.0
    %232 = vadd.xlane.f32.xlu0 %v231
    %v233 = vpop.xlane.xlu0 %232
    %v234 = vld [vmem:[%s2] sm:$0xff]
    %v235 = vld [vmem:[%s2 + $0x8] sm:$0xff]
    %v236 = vld [vmem:[%s2 + $0x10] sm:$0xff]
    %v237 = vld [vmem:[%s2 + $0x18] sm:$0xff]
    %v238 = vld [vmem:[%s2 + $0x20] sm:$0xff]
    %v239 = vld [vmem:[%s2 + $0x28] sm:$0xff]
    %v240 = vld [vmem:[%s2 + $0x30] sm:$0xff]
    %v241 = vld [vmem:[%s2 + $0x38] sm:$0xff]
    %v242 = vld [vmem:[%s1] sm:$0x1]
    %243 = vset.pattern.permute.xlu0 0
    %244 = vperm.xlu0 %243, %v234
    %v245 = vpop.permute.xlu0 %244
    %246 = vset.pattern.permute.xlu0 0
    %247 = vperm.xlu0 %246, %v235
    %v248 = vpop.permute.xlu0 %247
    %249 = vset.pattern.permute.xlu0 0
    %250 = vperm.xlu0 %249, %v236
    %v251 = vpop.permute.xlu0 %250
    %252 = vset.pattern.permute.xlu0 0
    %253 = vperm.xlu0 %252, %v237
    %v254 = vpop.permute.xlu0 %253
    %255 = vset.pattern.permute.xlu0 0
    %256 = vperm.xlu0 %255, %v238
    %v257 = vpop.permute.xlu0 %256
    %258 = vset.pattern.permute.xlu0 0
    %259 = vperm.xlu0 %258, %v239
    %v260 = vpop.permute.xlu0 %259
    %261 = vset.pattern.permute.xlu0 0
    %262 = vperm.xlu0 %261, %v240
    %v263 = vpop.permute.xlu0 %262
    %264 = vset.pattern.permute.xlu0 0
    %265 = vperm.xlu0 %264, %v241
    %v266 = vpop.permute.xlu0 %265
    %v267 = vperm.slane %v242, 0
    %vm268 = vcmp.eq.s32.totalorder %v245, %v267
    %vm269 = vcmp.eq.s32.totalorder %v248, %v267
    %vm270 = vcmp.eq.s32.totalorder %v251, %v267
    %vm271 = vcmp.eq.s32.totalorder %v254, %v267
    %vm272 = vcmp.eq.s32.totalorder %v257, %v267
    %vm273 = vcmp.eq.s32.totalorder %v260, %v267
    %vm274 = vcmp.eq.s32.totalorder %v263, %v267
    %vm275 = vcmp.eq.s32.totalorder %v266, %v267
    %v276 = vsel %vm268, %v195, 0.0
    %v277 = vsel %vm269, %v197, 0.0
    %v278 = vsel %vm270, %v199, 0.0
    %v279 = vsel %vm271, %v201, 0.0
    %v280 = vsel %vm272, %v203, 0.0
    %v281 = vsel %vm273, %v205, 0.0
    %v282 = vsel %vm274, %v207, 0.0
    %v283 = vsel %vm275, %v209, 0.0
    %v284 = vsel %vm161, %v276, 0.0
    %285 = vadd.xlane.f32.xlu0 %v284
    %v286 = vpop.xlane.xlu0 %285
    %v287 = vsel %vm161, %v277, 0.0
    %288 = vadd.xlane.f32.xlu0 %v287
    %v289 = vpop.xlane.xlu0 %288
    %v290 = vsel %vm161, %v278, 0.0
    %291 = vadd.xlane.f32.xlu0 %v290
    %v292 = vpop.xlane.xlu0 %291
    %v293 = vsel %vm161, %v279, 0.0
    %294 = vadd.xlane.f32.xlu0 %v293
    %v295 = vpop.xlane.xlu0 %294
    %v296 = vsel %vm161, %v280, 0.0
    %297 = vadd.xlane.f32.xlu0 %v296
    %v298 = vpop.xlane.xlu0 %297
    %v299 = vsel %vm161, %v281, 0.0
    %300 = vadd.xlane.f32.xlu0 %v299
    %v301 = vpop.xlane.xlu0 %300
    %v302 = vsel %vm161, %v282, 0.0
    %303 = vadd.xlane.f32.xlu0 %v302
    %v304 = vpop.xlane.xlu0 %303
    %v305 = vsel %vm161, %v283, 0.0
    %306 = vadd.xlane.f32.xlu0 %v305
    %v307 = vpop.xlane.xlu0 %306
    %v308 = vunpack.c.l.bf16 %v59
    %v309 = vunpack.c.l.bf16 %v60
    %v310 = vunpack.c.l.bf16 %v61
    %v311 = vunpack.c.l.bf16 %v62
    %v312 = vunpack.c.l.bf16 %v63
    %v313 = vunpack.c.l.bf16 %v64
    %v314 = vunpack.c.l.bf16 %v65
    %v315 = vunpack.c.l.bf16 %v66
    %v316 = vmul.f32 %v308, %v43
    %v317 = vmul.f32 %v309, %v44
    %v318 = vmul.f32 %v310, %v45
    %v319 = vmul.f32 %v311, %v46
    %v320 = vmul.f32 %v312, %v47
    %v321 = vmul.f32 %v313, %v48
    %v322 = vmul.f32 %v314, %v49
    %v323 = vmul.f32 %v315, %v50
    %v324 = vsel %vm107, %v316, 0.0
    %325 = vadd.xlane.f32.xlu0 %v324
    %v326 = vpop.xlane.xlu0 %325
    %v327 = vsel %vm107, %v317, 0.0
    %328 = vadd.xlane.f32.xlu0 %v327
    %v329 = vpop.xlane.xlu0 %328
    %v330 = vsel %vm107, %v318, 0.0
    %331 = vadd.xlane.f32.xlu0 %v330
    %v332 = vpop.xlane.xlu0 %331
    %v333 = vsel %vm107, %v319, 0.0
    %334 = vadd.xlane.f32.xlu0 %v333
    %v335 = vpop.xlane.xlu0 %334
    %v336 = vsel %vm107, %v320, 0.0
    %337 = vadd.xlane.f32.xlu0 %v336
    %v338 = vpop.xlane.xlu0 %337
    %v339 = vsel %vm107, %v321, 0.0
    %340 = vadd.xlane.f32.xlu0 %v339
    %v341 = vpop.xlane.xlu0 %340
    %v342 = vsel %vm107, %v322, 0.0
    %343 = vadd.xlane.f32.xlu0 %v342
    %v344 = vpop.xlane.xlu0 %343
    %v345 = vsel %vm107, %v323, 0.0
    %346 = vadd.xlane.f32.xlu0 %v345
    %v347 = vpop.xlane.xlu0 %346
    %v348 = vsub.f32 %v326, %v164
    %v349 = vsub.f32 %v329, %v167
    %v350 = vsub.f32 %v332, %v170
    %v351 = vsub.f32 %v335, %v173
    %v352 = vsub.f32 %v338, %v176
    %v353 = vsub.f32 %v341, %v179
    %v354 = vsub.f32 %v344, %v182
    %v355 = vsub.f32 %v347, %v185
    %v356 = vmul.f32 %v348, 1.442695
    %v357 = vpow.pop %v356
    %v358 = vmul.f32 %v349, 1.442695
    %v359 = vpow.pop %v358
    %v360 = vmul.f32 %v350, 1.442695
    %v361 = vpow.pop %v360
    %v362 = vmul.f32 %v351, 1.442695
    %v363 = vpow.pop %v362
    %v364 = vmul.f32 %v352, 1.442695
    %v365 = vpow.pop %v364
    %v366 = vmul.f32 %v353, 1.442695
    %v367 = vpow.pop %v366
    %v368 = vmul.f32 %v354, 1.442695
    %v369 = vpow.pop %v368
    %v370 = vmul.f32 %v355, 1.442695
    %v371 = vpow.pop %v370
    %v372 = vsub.f32 %v286, %v357
    %v373 = vsub.f32 %v289, %v359
    %v374 = vsub.f32 %v292, %v361
    %v375 = vsub.f32 %v295, %v363
    %v376 = vsub.f32 %v298, %v365
    %v377 = vsub.f32 %v301, %v367
    %v378 = vsub.f32 %v304, %v369
    %v379 = vsub.f32 %v307, %v371
    %v380 = vsub.f32 %v212, %v286
    %v381 = vsub.f32 %v215, %v289
    %v382 = vsub.f32 %v218, %v292
    %v383 = vsub.f32 %v221, %v295
    %v384 = vsub.f32 %v224, %v298
    %v385 = vsub.f32 %v227, %v301
    %v386 = vsub.f32 %v230, %v304
    %v387 = vsub.f32 %v233, %v307
    %v388 = vsub.f32 %v372, %v380
    %v389 = vsub.f32 %v373, %v381
    %v390 = vsub.f32 %v374, %v382
    %v391 = vsub.f32 %v375, %v383
    %v392 = vsub.f32 %v376, %v384
    %v393 = vsub.f32 %v377, %v385
    %v394 = vsub.f32 %v378, %v386
    %v395 = vsub.f32 %v379, %v387
    %v396 = vld [vmem:[%s3] sm:$0xff]
    %v397 = vld [vmem:[%s3 + $0x8] sm:$0xff]
    %v398 = vld [vmem:[%s3 + $0x10] sm:$0xff]
    %v399 = vld [vmem:[%s3 + $0x18] sm:$0xff]
    %v400 = vld [vmem:[%s3 + $0x20] sm:$0xff]
    %v401 = vld [vmem:[%s3 + $0x28] sm:$0xff]
    %v402 = vld [vmem:[%s3 + $0x30] sm:$0xff]
    %v403 = vld [vmem:[%s3 + $0x38] sm:$0xff]
    %vm404 = vcmp.ge.f32.partialorder %v396, 0.5
    %vm405 = vcmp.ge.f32.partialorder %v397, 0.5
    %vm406 = vcmp.ge.f32.partialorder %v398, 0.5
    %vm407 = vcmp.ge.f32.partialorder %v399, 0.5
    %vm408 = vcmp.ge.f32.partialorder %v400, 0.5
    %vm409 = vcmp.ge.f32.partialorder %v401, 0.5
    %vm410 = vcmp.ge.f32.partialorder %v402, 0.5
    %vm411 = vcmp.ge.f32.partialorder %v403, 0.5
    %v412 = vsub.f32 0.0, %v388
    %v413 = vsub.f32 0.0, %v389
    %v414 = vsub.f32 0.0, %v390
    %v415 = vsub.f32 0.0, %v391
    %v416 = vsub.f32 0.0, %v392
    %v417 = vsub.f32 0.0, %v393
    %v418 = vsub.f32 0.0, %v394
    %v419 = vsub.f32 0.0, %v395
    %v420 = vsel %vm404, %v412, 0.0
    %v421 = vsel %vm405, %v413, 0.0
    %v422 = vsel %vm406, %v414, 0.0
    %v423 = vsel %vm407, %v415, 0.0
    %v424 = vsel %vm408, %v416, 0.0
    %v425 = vsel %vm409, %v417, 0.0
    %v426 = vsel %vm410, %v418, 0.0
    %v427 = vsel %vm411, %v419, 0.0
    %vm428 = vcmask 7168
    %v429 = vsel %vm428, %v420, 0.0
    %v430 = vsel %vm428, %v421, 0.0
    %v431 = vadd.f32 %v429, %v430
    %v432 = vsel %vm428, %v422, 0.0
    %v433 = vadd.f32 %v431, %v432
    %v434 = vsel %vm428, %v423, 0.0
    %v435 = vadd.f32 %v433, %v434
    %v436 = vsel %vm428, %v424, 0.0
    %v437 = vadd.f32 %v435, %v436
    %v438 = vsel %vm428, %v425, 0.0
    %v439 = vadd.f32 %v437, %v438
    %v440 = vsel %vm428, %v426, 0.0
    %v441 = vadd.f32 %v439, %v440
    %v442 = vsel %vm428, %v427, 0.0
    %v443 = vadd.f32 %v441, %v442
    %444 = vadd.xlane.f32.xlu0 %v443
    %v445 = vpop.xlane.xlu0 %444
    %v446 = vrot.slane %v445, 4
    %v447 = vadd.f32 %v445, %v446
    %v448 = vrot.slane %v447, 2
    %v449 = vadd.f32 %v447, %v448
    %v450 = vrot.slane %v449, 1
    %v451 = vadd.f32 %v449, %v450
    %s452 = vtos %v451
    %v453 = vstv %s452
    %vm454 = vcmask 0
    %455 = vst.msk [vmem:[#allocation2] sm:$0x1] %vm454, %v453
    %v456 = vsel %vm404, 1, 0
    %v457 = vsel %vm405, 1, 0
    %v458 = vsel %vm406, 1, 0
    %v459 = vsel %vm407, 1, 0
    %v460 = vsel %vm408, 1, 0
    %v461 = vsel %vm409, 1, 0
    %v462 = vsel %vm410, 1, 0
    %v463 = vsel %vm411, 1, 0
    %v464 = vcvt.s32.f32 %v456
    %v465 = vcvt.s32.f32 %v457
    %v466 = vcvt.s32.f32 %v458
    %v467 = vcvt.s32.f32 %v459
    %v468 = vcvt.s32.f32 %v460
    %v469 = vcvt.s32.f32 %v461
    %v470 = vcvt.s32.f32 %v462
    %v471 = vcvt.s32.f32 %v463
    %v472 = vsel %vm428, %v464, 0.0
    %v473 = vsel %vm428, %v465, 0.0
    %v474 = vadd.f32 %v472, %v473
    %v475 = vsel %vm428, %v466, 0.0
    %v476 = vadd.f32 %v474, %v475
    %v477 = vsel %vm428, %v467, 0.0
    %v478 = vadd.f32 %v476, %v477
    %v479 = vsel %vm428, %v468, 0.0
    %v480 = vadd.f32 %v478, %v479
    %v481 = vsel %vm428, %v469, 0.0
    %v482 = vadd.f32 %v480, %v481
    %v483 = vsel %vm428, %v470, 0.0
    %v484 = vadd.f32 %v482, %v483
    %v485 = vsel %vm428, %v471, 0.0
    %v486 = vadd.f32 %v484, %v485
    %487 = vadd.xlane.f32.xlu0 %v486
    %v488 = vpop.xlane.xlu0 %487
    %v489 = vrot.slane %v488, 4
    %v490 = vadd.f32 %v488, %v489
    %v491 = vrot.slane %v490, 2
    %v492 = vadd.f32 %v490, %v491
    %v493 = vrot.slane %v492, 1
    %v494 = vadd.f32 %v492, %v493
    %s495 = vtos %v494
    %v496 = vstv %s495
    %497 = vst.msk [vmem:[#allocation4] sm:$0x1] %vm454, %v496
    // Predicated region
    $region18: #{tpu_custom_call.1} parent=1 // pred_check
      _
    $region19: #{tpu_custom_call.1} parent=1 // pred_check_branch
      %499 = sbr.rel (0) target = $region21
    $region20: #{tpu_custom_call.1} parent=1 // pred_region
      %501 = vsyncadd [#allocation3], 0
      %s503 = sshll.u32 [#allocation2], 4
      %s504 = int_to_ptr.vmem [resolvable:$true] %s503
      %s505 = sshll.u32 %s4, 4
      %s506 = int_to_ptr.hbm [resolvable:$true] %s505
      %508 = dma.vmem_to_hbm [thread:$0]  %s504, 16, %s506, [#allocation3]
    $region21: #{tpu_custom_call.1} parent=1 // pred_fallthru
      _
    // Predicated region
    $region22: #{tpu_custom_call.1} parent=1 // pred_check
      _
    $region23: #{tpu_custom_call.1} parent=1 // pred_check_branch
      %510 = sbr.rel (0) target = $region25
    $region24: #{tpu_custom_call.1} parent=1 // pred_region
      %512 = vsyncadd [#allocation5], 0
      %s514 = sshll.u32 [#allocation4], 4
      %s515 = int_to_ptr.vmem [resolvable:$true] %s514
      %s516 = sshll.u32 %s5, 4
      %s517 = int_to_ptr.hbm [resolvable:$true] %s516
      %519 = dma.vmem_to_hbm [thread:$0]  %s515, 16, %s517, [#allocation5]
    $region25: #{tpu_custom_call.1} parent=1 // pred_fallthru
      _
    // Predicated region
    $region26: #{tpu_custom_call.1} parent=1 // pred_check
      _
    $region27: #{tpu_custom_call.1} parent=1 // pred_check_branch
      %521 = sbr.rel (0) target = $region29
    $region28: #{tpu_custom_call.1} parent=1 // pred_region
      %523 = dma.done [#allocation3], 16
    $region29: #{tpu_custom_call.1} parent=1 // pred_fallthru
      _
    // Predicated region
    $region30: #{tpu_custom_call.1} parent=1 // pred_check
      _
    $region31: #{tpu_custom_call.1} parent=1 // pred_check_branch
      %525 = sbr.rel (0) target = $region33
    $region32: #{tpu_custom_call.1} parent=1 // pred_region
      %527 = dma.done [#allocation5], 16
    $region33: #{tpu_custom_call.1} parent=1 // pred_fallthru
      _
    %528 = vsyncpa [#allocation3], 1
    %529 = vsyncpa [#allocation5], 1

</llo_original>
